<compile_context>
chip_gen: v5e
topology: v5e:2x2
jax: 0.10.0
libtpu: 0.0.40
codegen_flags: <defaults>
</compile_context>

<pallas_src>
import functools
import math

import jax
import jax.numpy as jnp
from jax.experimental import pallas as pl
from jax.experimental.pallas import tpu as pltpu


def _round_up(x, m):
    return (x + m - 1) // m * m


# ----------------------------------------------------------------------------
# Kernels
# ----------------------------------------------------------------------------
def _glu_kernel_single_k(x_ref, w_ref, b_ref, o_ref, *, tn):
    """Fast path: the whole K dimension fits one block -> no accumulator."""
    y = jnp.dot(x_ref[...], w_ref[...], preferred_element_type=jnp.float32)
    y = y + b_ref[...]                        # (block_m, 2*tn), f32
    lin = y[:, :tn]                           # L branch (activation=None)
    gate = jax.nn.sigmoid(y[:, tn:])          # G branch, f32 sigmoid (EUP)
    o_ref[...] = (lin * gate).astype(o_ref.dtype)


def _glu_kernel_multi_k(x_ref, w_ref, b_ref, o_ref, acc_ref, *, tn):
    """K-reduction path: f32 VMEM accumulator over the innermost grid axis.

    w_ref block is (block_k, 2*tn): columns [0:tn] are the linear branch W_L,
    columns [tn:2*tn] are the gate branch W_G for this N-tile.
    """
    k = pl.program_id(2)
    p = jnp.dot(x_ref[...], w_ref[...], preferred_element_type=jnp.float32)

    @pl.when(k == 0)
    def _():
        acc_ref[...] = p          # overwrite: saves a zero-store + re-load

    @pl.when(k > 0)
    def _():
        acc_ref[...] += p

    @pl.when(k == pl.num_programs(2) - 1)
    def _():
        y = acc_ref[...] + b_ref[...]
        o_ref[...] = (y[:, :tn] * jax.nn.sigmoid(y[:, tn:])).astype(o_ref.dtype)


# ----------------------------------------------------------------------------
# One-time parameter preparation (NOT per forward call)
# ----------------------------------------------------------------------------
def prepare_glu_params(w_l, b_l, w_g, b_g, matmul_dtype=jnp.bfloat16):
    """Transpose (N,K)->(K,N), zero-pad, interleave L/G per N-tile into one
    fused weight (bf16) / bias (f32).  Returns (w_fused, b_fused, cfg)."""
    N, K = w_l.shape

    # Lane-dense N tile.  512 only when it keeps n_tiles >= 2 (v7x dual-TC).
    n128 = _round_up(N, 128)
    if n128 % 512 == 0 and n128 // 512 >= 2:
        tn = 512
    elif n128 % 256 == 0:
        tn = 256
    else:
        tn = 128
    N_pad = _round_up(N, tn)
    n_tiles = N_pad // tn

    # K reduction tile (innermost grid axis), multiple of 128, up to 2048.
    K_pad = _round_up(K, 128)
    if K_pad <= 2048:
        block_k = K_pad                      # single-K fast path
    else:
        block_k = 128
        for cand in (2048, 1536, 1024, 768, 512, 384, 256):
            if K_pad % cand == 0:
                block_k = cand
                break

    def prep_w(w):
        wt = jnp.asarray(w, jnp.float32).T                     # (K, N)
        wt = jnp.pad(wt, ((0, K_pad - K), (0, N_pad - N)))     # zero pad
        return wt.reshape(K_pad, n_tiles, tn)

    def prep_b(b):
        b = jnp.pad(jnp.asarray(b, jnp.float32), (0, N_pad - N))
        return b.reshape(n_tiles, tn)

    # Interleave per tile: [..., tile, {L,G}, tn] -> (K_pad, n_tiles*2*tn)
    w_fused = jnp.stack([prep_w(w_l), prep_w(w_g)], axis=2).reshape(
        K_pad, n_tiles * 2 * tn
    ).astype(matmul_dtype)                                      # bf16 weights
    b_fused = jnp.stack([prep_b(b_l), prep_b(b_g)], axis=1).reshape(
        1, n_tiles * 2 * tn
    )                                                           # f32 bias

    cfg = dict(n=N, k=K, tn=tn, block_k=block_k)
    return w_fused, b_fused, cfg


# ----------------------------------------------------------------------------
# Forward wrapper
# ----------------------------------------------------------------------------
@functools.partial(jax.jit, static_argnames=("n", "tn", "block_k", "block_m"))
def glu_he_forward(x, w_fused, b_fused, *, n, tn, block_k, block_m=None):
    """x: (M, K); w_fused/b_fused from prepare_glu_params. Returns (M, n)."""
    M, K = x.shape
    K_pad, wn = w_fused.shape
    n_tiles = wn // (2 * tn)
    N_pad = n_tiles * tn

    if block_m is None:
        # Multiple of 16 (bf16 sublane packing); shrink if padding waste is big.
        block_m = min(512, _round_up(max(M, 1), 16))
        while block_m > 16 and _round_up(M, block_m) - M >= block_m // 2:
            block_m //= 2
    M_pad = _round_up(M, block_m)

    x_p = x
    if (M_pad, K_pad) != (M, K):
        # Zero-padded K columns contribute nothing; padded M rows are sliced off.
        x_p = jnp.pad(x, ((0, M_pad - M), (0, K_pad - K)))
    x_p = x_p.astype(w_fused.dtype)          # bf16 operand for the MXU

    n_k = K_pad // block_k
    out_dtype = x.dtype
    w_item = jnp.dtype(w_fused.dtype).itemsize

    cost = pl.CostEstimate(
        flops=4 * M_pad * K_pad * N_pad,
        transcendentals=M_pad * N_pad,
        bytes_accessed=(w_item * M_pad * K_pad
                        + w_item * K_pad * 2 * N_pad
                        + 4 * 2 * N_pad
                        + jnp.dtype(out_dtype).itemsize * M_pad * N_pad),
    )

    if n_k == 1:
        # ---- single-K fast path: 2-D grid, no accumulator scratch ----
        grid_spec = pltpu.PrefetchScalarGridSpec(
            num_scalar_prefetch=0,
            grid=(M_pad // block_m, n_tiles),
            in_specs=[
                pl.BlockSpec((block_m, block_k), lambda i, j: (i, 0)),   # x
                pl.BlockSpec((block_k, 2 * tn), lambda i, j: (0, j)),    # W fused
                pl.BlockSpec((1, 2 * tn), lambda i, j: (0, j)),          # bias
            ],
            out_specs=pl.BlockSpec((block_m, tn), lambda i, j: (i, j)),
        )
        kern = functools.partial(_glu_kernel_single_k, tn=tn)
        dim_sem = ("parallel", "parallel")
    else:
        # ---- K-reduction path: 3-D grid, f32 accumulator ----
        grid_spec = pltpu.PrefetchScalarGridSpec(
            num_scalar_prefetch=0,
            grid=(M_pad // block_m, n_tiles, n_k),
            in_specs=[
                pl.BlockSpec((block_m, block_k), lambda i, j, k: (i, k)),
                pl.BlockSpec((block_k, 2 * tn), lambda i, j, k: (k, j)),
                pl.BlockSpec((1, 2 * tn), lambda i, j, k: (0, j)),
            ],
            out_specs=pl.BlockSpec((block_m, tn), lambda i, j, k: (i, j)),
            scratch_shapes=[pltpu.VMEM((block_m, 2 * tn), jnp.float32)],
        )
        kern = functools.partial(_glu_kernel_multi_k, tn=tn)
        dim_sem = ("parallel", "parallel", "arbitrary")

    out_pad = pl.pallas_call(
        kern,
        out_shape=jax.ShapeDtypeStruct((M_pad, N_pad), out_dtype),
        grid_spec=grid_spec,
        compiler_params=pltpu.CompilerParams(
            dimension_semantics=dim_sem,
            vmem_limit_bytes=48 * 1024 * 1024,   # safe on v7x (64 MiB/TC), wide on v5e/v6e
        ),
        cost_estimate=cost,
    )(x_p, w_fused, b_fused)

    return out_pad[:M, :n]


# ----------------------------------------------------------------------------
# Init + reference (mirrors the PyTorch module)
# ----------------------------------------------------------------------------
def init_glu_params(key, input_dim, output_dim, dtype=jnp.float32):
    """weights: kaiming_normal_ (fan_in, gain=sqrt(2)) -> std = sqrt(2/input_dim)
       biases : nn.Linear default uniform(-1/sqrt(fan_in), 1/sqrt(fan_in))"""
    k1, k2, k3, k4 = jax.random.split(key, 4)
    std = math.sqrt(2.0 / input_dim)
    bound = 1.0 / math.sqrt(input_dim)
    w_l = std * jax.random.normal(k1, (output_dim, input_dim), dtype)
    w_g = std * jax.random.normal(k2, (output_dim, input_dim), dtype)
    b_l = jax.random.uniform(k3, (output_dim,), dtype, -bound, bound)
    b_g = jax.random.uniform(k4, (output_dim,), dtype, -bound, bound)
    return w_l, b_l, w_g, b_g


def glu_reference(x, w_l, b_l, w_g, b_g):
    L = x @ w_l.T + b_l
    G = jax.nn.sigmoid(x @ w_g.T + b_g)
    return L * G


if __name__ == "__main__":
    key = jax.random.PRNGKey(0)
    TOL = dict(atol=5e-2, rtol=5e-2)   # bf16 operands, f32 accumulation

    # --- test 1: module's toy shapes (single-K fast path) ---
    batch, input_dim, output_dim = 8, 32, 32
    kx, kp, krest = jax.random.split(key, 3)
    x = jax.random.normal(kx, (batch, input_dim), jnp.float32)
    w_l, b_l, w_g, b_g = init_glu_params(kp, input_dim, output_dim)

    w_fused, b_fused, cfg = prepare_glu_params(w_l, b_l, w_g, b_g)  # one-time prep
    out = glu_he_forward(x, w_fused, b_fused,
                         n=cfg["n"], tn=cfg["tn"], block_k=cfg["block_k"])
    out = jax.block_until_ready(out)
    ref = glu_reference(x, w_l, b_l, w_g, b_g)
    assert out.shape == (batch, output_dim)
    assert jnp.allclose(out, ref, **TOL), "mismatch vs reference (test 1)"

    # --- test 2: ragged shapes exercise the M/K/N padding paths ---
    b2, k2d, n2d = 5, 40, 50
    kx2, kp2, krest = jax.random.split(krest, 3)
    x2 = jax.random.normal(kx2, (b2, k2d), jnp.float32)
    w_l2, b_l2, w_g2, b_g2 = init_glu_params(kp2, k2d, n2d)
    wf2, bf2, cfg2 = prepare_glu_params(w_l2, b_l2, w_g2, b_g2)
    out2 = glu_he_forward(x2, wf2, bf2,
                          n=cfg2["n"], tn=cfg2["tn"], block_k=cfg2["block_k"])
    out2 = jax.block_until_ready(out2)
    ref2 = glu_reference(x2, w_l2, b_l2, w_g2, b_g2)
    assert out2.shape == (b2, n2d)
    assert jnp.allclose(out2, ref2, **TOL), "ragged mismatch (test 2)"

    # --- test 3: large K exercises the multi-K accumulator path ---
    b3, k3d, n3d = 64, 4096, 256
    kx3, kp3 = jax.random.split(krest)
    x3 = jax.random.normal(kx3, (b3, k3d), jnp.float32)
    w_l3, b_l3, w_g3, b_g3 = init_glu_params(kp3, k3d, n3d)
    wf3, bf3, cfg3 = prepare_glu_params(w_l3, b_l3, w_g3, b_g3)
    out3 = glu_he_forward(x3, wf3, bf3,
                          n=cfg3["n"], tn=cfg3["tn"], block_k=cfg3["block_k"])
    out3 = jax.block_until_ready(out3)
    ref3 = glu_reference(x3, w_l3, b_l3, w_g3, b_g3)
    assert out3.shape == (b3, n3d)
    assert jnp.allclose(out3, ref3, **TOL), "multi-K mismatch (test 3)"

    print("KERNEL_OK")
</pallas_src>

<mosaic_0001>
module attributes {stable_mosaic.version = 11 : i64} {
  func.func @_glu_kernel_single_k(%arg0: i32, %arg1: i32, %arg2: memref<16x128xbf16, #tpu.memory_space<vmem>>, %arg3: memref<128x256xbf16, #tpu.memory_space<vmem>>, %arg4: memref<1x256xf32, #tpu.memory_space<vmem>>, %arg5: memref<16x128xf32, #tpu.memory_space<vmem>>) attributes {dimension_semantics = [#tpu.dimension_semantics<parallel>, #tpu.dimension_semantics<parallel>], iteration_bounds = array<i64: 1, 1>, scalar_prefetch = 0 : i64, scratch_operands = 0 : i64, tpu.core_type = #tpu.core_type<tc>, window_params = [{transform_indices = @transform_0, window_bounds = array<i64: 16, 128>}, {transform_indices = @transform_1, window_bounds = array<i64: 128, 256>}, {transform_indices = @transform_2, window_bounds = array<i64: 1, 256>}, {transform_indices = @transform_3, window_bounds = array<i64: 16, 128>}]} {
    %c0 = arith.constant 0 : index
    %c0_0 = arith.constant 0 : index
    %0 = vector.load %arg2[%c0, %c0_0] : memref<16x128xbf16, #tpu.memory_space<vmem>>, vector<16x128xbf16>
    %c0_1 = arith.constant 0 : index
    %c0_2 = arith.constant 0 : index
    %1 = vector.load %arg3[%c0_1, %c0_2] : memref<128x256xbf16, #tpu.memory_space<vmem>>, vector<128x256xbf16>
    %cst = arith.constant dense<0.000000e+00> : vector<16x256xf32>
    %2 = tpu.matmul %0, %1, %cst {dimension_numbers = #tpu.dot_dimension_numbers<[1], [0], [0], [1], [0, 0, 1, 1], [], []>} : vector<16x128xbf16>, vector<128x256xbf16>, vector<16x256xf32> -> vector<16x256xf32>
    %c0_3 = arith.constant 0 : index
    %c0_4 = arith.constant 0 : index
    %3 = vector.load %arg4[%c0_3, %c0_4] : memref<1x256xf32, #tpu.memory_space<vmem>>, vector<1x256xf32>
    %4 = vector.broadcast %3 : vector<1x256xf32> to vector<16x256xf32>
    %5 = arith.addf %2, %4 : vector<16x256xf32>
    %6 = vector.extract_strided_slice %5 {offsets = [0, 0], sizes = [16, 128], strides = [1, 1]} : vector<16x256xf32> to vector<16x128xf32>
    %7 = vector.extract_strided_slice %5 {offsets = [0, 128], sizes = [16, 128], strides = [1, 1]} : vector<16x256xf32> to vector<16x128xf32>
    %8 = arith.negf %7 : vector<16x128xf32>
    %9 = math.exp %8 : vector<16x128xf32>
    %cst_5 = arith.constant 1.000000e+00 : f32
    %10 = vector.broadcast %cst_5 : f32 to vector<16x128xf32>
    %11 = arith.addf %10, %9 : vector<16x128xf32>
    %12 = arith.divf %10, %11 : vector<16x128xf32>
    %13 = arith.mulf %6, %12 : vector<16x128xf32>
    %c0_6 = arith.constant 0 : index
    %c0_7 = arith.constant 0 : index
    %14 = vector.load %arg5[%c0_6, %c0_7] : memref<16x128xf32, #tpu.memory_space<vmem>>, vector<16x128xf32>
    tpu.vector_store %arg5[%c0_6, %c0_7], %13 {strides = array<i32>} : memref<16x128xf32, #tpu.memory_space<vmem>>, vector<16x128xf32>,
    return
  }
  func.func @transform_0(%arg0: i32, %arg1: i32) -> (i32, i32) {
    %c0_i32 = arith.constant 0 : i32
    %c0_i32_0 = arith.constant 0 : i32
    return %arg0, %c0_i32 : i32, i32
  }
  func.func @transform_1(%arg0: i32, %arg1: i32) -> (i32, i32) {
    %c0_i32 = arith.constant 0 : i32
    %c0_i32_0 = arith.constant 0 : i32
    return %c0_i32, %arg1 : i32, i32
  }
  func.func @transform_2(%arg0: i32, %arg1: i32) -> (i32, i32) {
    %c0_i32 = arith.constant 0 : i32
    %c0_i32_0 = arith.constant 0 : i32
    return %c0_i32, %arg1 : i32, i32
  }
  func.func @transform_3(%arg0: i32, %arg1: i32) -> (i32, i32) {
    %c0_i32 = arith.constant 0 : i32
    return %arg0, %arg1 : i32, i32
  }
}

</mosaic_0001>

<llo_original>
// kernel: glu_he_forward.1
$region0: #{glu_he_forward.1}
  #allocation0 [shape = 'u32[]', space=smem, size = 0x4, offset = 0x4, fixed_abs, tag = 'smem constant byte address 0x4 - core index']
  #allocation1 [shape = 'u32[72,128]{1,0:T(1,128)}', space=vmem, size = 0x9000, scoped, tag = 'internal scratch']
  %s0 = inlined_call_operand.vmem [shape: bf16[16,128], index: 0, kind: input, shape index: {}]
  %s1 = inlined_call_operand.hbm [shape: bf16[128,256], index: 1, kind: input, shape index: {}]
  %s2 = inlined_call_operand.vmem [shape: f32[1,256], index: 2, kind: input, shape index: {}]
  %s3 = inlined_call_operand.vmem [shape: f32[16,128], index: 3, kind: output, shape index: {}]
  %s4 = sld [smem:[#allocation0]]
  $region26: #{glu_he_forward.1} parent=0
    _
  %s6 = ssub.s32 1, %s4
  %s7 = scalar_select 0, %s6, %s4
  $region1: #{glu_he_forward.1} parent=0
    #allocation2 [shape = 'u8[65536]{0}', space=vmem, size = 0x10000, scoped, tag = 'input window, operand 1, single buffered']
    #allocation3 [shape = 's32[1]{0}', space=sflag, size = 0x4, scoped, tag = 'scoped memory for glu_he_forward.1']
    %8 = vsyncpa [#allocation3], 0
    // Predicated region
    $region2: #{glu_he_forward.1} parent=1 // pred_check
      _
    $region3: #{glu_he_forward.1} parent=1 // pred_check_branch
      %10 = sbr.rel (0) target = $region5
    $region4: #{glu_he_forward.1} parent=1 // pred_region
      _
    $region5: #{glu_he_forward.1} parent=1 // pred_fallthru
      _
    // Predicated region
    $region6: #{glu_he_forward.1} parent=1 // pred_check
      _
    $region7: #{glu_he_forward.1} parent=1 // pred_check_branch
      %12 = sbr.rel (0) target = $region9
    $region8: #{glu_he_forward.1} parent=1 // pred_region
      %14 = vsyncadd [#allocation3], 0
      %s15 = sshll.u32 %s1, 4
      %s16 = int_to_ptr.hbm [resolvable:$true] %s15
      %s17 = sshll.u32 [#allocation2], 4
      %s18 = int_to_ptr.vmem [resolvable:$true] %s17
      %23 = dma.hbm_to_vmem [thread:$0]  %s16, 2048, %s18, [#allocation3], 128, 128, 8
    $region9: #{glu_he_forward.1} parent=1 // pred_fallthru
      _
    // Predicated region
    $region10: #{glu_he_forward.1} parent=1 // pred_check
      _
    $region11: #{glu_he_forward.1} parent=1 // pred_check_branch
      %25 = sbr.rel (0) target = $region13
    $region12: #{glu_he_forward.1} parent=1 // pred_region
      _
    $region13: #{glu_he_forward.1} parent=1 // pred_fallthru
      _
    // Predicated region
    $region14: #{glu_he_forward.1} parent=1 // pred_check
      _
    $region15: #{glu_he_forward.1} parent=1 // pred_check_branch
      %27 = sbr.rel (0) target = $region17
    $region16: #{glu_he_forward.1} parent=1 // pred_region
      %29 = dma.done [#allocation3], 2048
    $region17: #{glu_he_forward.1} parent=1 // pred_fallthru
      _
    %v30 = vld [vmem:[%s0] sm:$0xf]
    %v31 = vld [vmem:[%s0 + $0x4] sm:$0xf]
    %v32 = vld [vmem:[#allocation2] sm:$0xff]
    %v33 = vld [vmem:[#allocation2 + $0x8] sm:$0xff]
    %v34 = vld [vmem:[#allocation2 + $0x10] sm:$0xff]
    %v35 = vld [vmem:[#allocation2 + $0x18] sm:$0xff]
    %v36 = vld [vmem:[#allocation2 + $0x20] sm:$0xff]
    %v37 = vld [vmem:[#allocation2 + $0x28] sm:$0xff]
    %v38 = vld [vmem:[#allocation2 + $0x30] sm:$0xff]
    %v39 = vld [vmem:[#allocation2 + $0x38] sm:$0xff]
    %v40 = vld [vmem:[#allocation2 + $0x40] sm:$0xff]
    %v41 = vld [vmem:[#allocation2 + $0x48] sm:$0xff]
    %v42 = vld [vmem:[#allocation2 + $0x50] sm:$0xff]
    %v43 = vld [vmem:[#allocation2 + $0x58] sm:$0xff]
    %v44 = vld [vmem:[#allocation2 + $0x60] sm:$0xff]
    %v45 = vld [vmem:[#allocation2 + $0x68] sm:$0xff]
    %v46 = vld [vmem:[#allocation2 + $0x70] sm:$0xff]
    %v47 = vld [vmem:[#allocation2 + $0x78] sm:$0xff]
    %v48 = vld [vmem:[%s2] sm:$0x3]
    %v50 = vperm.slane %v48, 0
    %v51 = vperm.slane %v48, 1
    %v56 = vunpack.c.l.b16 %v30
    %v57 = vunpack.c.l.b16 %v31
    %v58 = vpack.c.b16 %v57, %v56
    %v76 = vunpack.c.l.b16 %v32
    %v77 = vunpack.c.h.b16 %v32
    %v78 = vunpack.c.l.b16 %v33
    %v79 = vunpack.c.h.b16 %v33
    %v80 = vunpack.c.l.b16 %v34
    %v81 = vunpack.c.h.b16 %v34
    %v82 = vunpack.c.l.b16 %v35
    %v83 = vunpack.c.h.b16 %v35
    %v84 = vunpack.c.l.b16 %v36
    %v85 = vunpack.c.h.b16 %v36
    %v86 = vunpack.c.l.b16 %v37
    %v87 = vunpack.c.h.b16 %v37
    %v88 = vunpack.c.l.b16 %v38
    %v89 = vunpack.c.h.b16 %v38
    %v90 = vunpack.c.l.b16 %v39
    %v91 = vunpack.c.h.b16 %v39
    %v92 = vunpack.c.l.b16 %v40
    %v93 = vunpack.c.h.b16 %v40
    %v94 = vunpack.c.l.b16 %v41
    %v95 = vunpack.c.h.b16 %v41
    %v96 = vunpack.c.l.b16 %v42
    %v97 = vunpack.c.h.b16 %v42
    %v98 = vunpack.c.l.b16 %v43
    %v99 = vunpack.c.h.b16 %v43
    %v100 = vunpack.c.l.b16 %v44
    %v101 = vunpack.c.h.b16 %v44
    %v102 = vunpack.c.l.b16 %v45
    %v103 = vunpack.c.h.b16 %v45
    %v104 = vunpack.c.l.b16 %v46
    %v105 = vunpack.c.h.b16 %v46
    %v106 = vunpack.c.l.b16 %v47
    %v107 = vunpack.c.h.b16 %v47
    %v108 = vpack.c.b16 %v78, %v76
    %v109 = vpack.c.b16 %v79, %v77
    %v110 = vpack.c.b16 %v82, %v80
    %v111 = vpack.c.b16 %v83, %v81
    %v112 = vpack.c.b16 %v86, %v84
    %v113 = vpack.c.b16 %v87, %v85
    %v114 = vpack.c.b16 %v90, %v88
    %v115 = vpack.c.b16 %v91, %v89
    %v116 = vpack.c.b16 %v94, %v92
    %v117 = vpack.c.b16 %v95, %v93
    %v118 = vpack.c.b16 %v98, %v96
    %v119 = vpack.c.b16 %v99, %v97
    %v120 = vpack.c.b16 %v102, %v100
    %v121 = vpack.c.b16 %v103, %v101
    %v122 = vpack.c.b16 %v106, %v104
    %v123 = vpack.c.b16 %v107, %v105
    %140 = vmatpush.bf16.msra.mxu0 %v122
    %141 = vmatpush.bf16.msra.mxu0 %v120
    %142 = vmatpush.bf16.msra.mxu0 %v118
    %143 = vmatpush.bf16.msra.mxu0 %v116
    %144 = vmatpush.bf16.msra.mxu0 %v114
    %145 = vmatpush.bf16.msra.mxu0 %v112
    %146 = vmatpush.bf16.msra.mxu0 %v110
    %147 = vmatpush.bf16.msra.mxu0 %v108
    %148 = vmatmul.bf16.gmra.mxu0 %v58
    %v149 = vpop.f32.mrf.mxu0
    %v150 = vadd.f32 %v50, %v149
    %v151 = vpop.f32.mrf.mxu0
    %v152 = vadd.f32 %v50, %v151
    %153 = vdwg.mxu0
    %154 = vmatpush.bf16.msra.mxu0 %v123
    %155 = vmatpush.bf16.msra.mxu0 %v121
    %156 = vmatpush.bf16.msra.mxu0 %v119
    %157 = vmatpush.bf16.msra.mxu0 %v117
    %158 = vmatpush.bf16.msra.mxu0 %v115
    %159 = vmatpush.bf16.msra.mxu0 %v113
    %160 = vmatpush.bf16.msra.mxu0 %v111
    %161 = vmatpush.bf16.msra.mxu0 %v109
    %162 = vmatmul.bf16.gmra.mxu0 %v58
    %v163 = vpop.f32.mrf.mxu0
    %v164 = vadd.f32 %v51, %v163
    %v165 = vpop.f32.mrf.mxu0
    %v166 = vadd.f32 %v51, %v165
    %167 = vdwg.mxu0
    %v168 = vxor.u32 %v164, 2147483648
    %v169 = vxor.u32 %v166, 2147483648
    %v170 = vmul.f32 %v168, 1.442695
    %v171 = vpow.pop %v170
    %v172 = vmul.f32 %v169, 1.442695
    %v173 = vpow.pop %v172
    %v174 = vadd.f32 %v171, 1.0
    %v175 = vadd.f32 %v173, 1.0
    %v176 = vrcp.pop %v174
    %v177 = vmul.f32 %v174, %v176
    %v178 = vsub.f32 1.0, %v177
    %v179 = vmul.f32 %v176, %v178
    %v180 = vadd.f32 %v176, %v179
    %vm181 = vweird.f32 %v174
    %vm182 = vweird.f32 %v176
    %vm183 = vmor %vm181, %vm182
    %v184 = vsel %vm183, %v176, %v180
    %v185 = vand.u32 2147483647, %v174
    %vm186 = vcmp.eq.f32.partialorder %v185, 8.507059e+37
    %v187 = vand.u32 %v174, 2147483648
    %v188 = vor.u32 1.1754944e-38, %v187
    %v189 = vsel %vm186, %v188, %v184
    %v190 = vmul.f32 1.0, %v189
    %v191 = vrcp.pop %v175
    %v192 = vmul.f32 %v175, %v191
    %v193 = vsub.f32 1.0, %v192
    %v194 = vmul.f32 %v191, %v193
    %v195 = vadd.f32 %v191, %v194
    %vm196 = vweird.f32 %v175
    %vm197 = vweird.f32 %v191
    %vm198 = vmor %vm196, %vm197
    %v199 = vsel %vm198, %v191, %v195
    %v200 = vand.u32 2147483647, %v175
    %vm201 = vcmp.eq.f32.partialorder %v200, 8.507059e+37
    %v202 = vand.u32 %v175, 2147483648
    %v203 = vor.u32 1.1754944e-38, %v202
    %v204 = vsel %vm201, %v203, %v199
    %v205 = vmul.f32 1.0, %v204
    %v206 = vmul.f32 %v150, %v190
    %v207 = vmul.f32 %v152, %v205
    %208 = vst [vmem:[%s3] sm:$0xff] %v206
    %209 = vst [vmem:[%s3 + $0x8] sm:$0xff] %v207
    // Predicated region
    $region18: #{glu_he_forward.1} parent=1 // pred_check
      _
    $region19: #{glu_he_forward.1} parent=1 // pred_check_branch
      %211 = sbr.rel (0) target = $region21
    $region20: #{glu_he_forward.1} parent=1 // pred_region
      _
    $region21: #{glu_he_forward.1} parent=1 // pred_fallthru
      _
    // Predicated region
    $region22: #{glu_he_forward.1} parent=1 // pred_check
      _
    $region23: #{glu_he_forward.1} parent=1 // pred_check_branch
      %213 = sbr.rel (0) target = $region25
    $region24: #{glu_he_forward.1} parent=1 // pred_region
      _
    $region25: #{glu_he_forward.1} parent=1 // pred_fallthru
      _
    %214 = vsyncpa [#allocation3], 1

</llo_original>
